<compile_context>
chip_gen: v7x
topology: tpu7x:2x2x1
jax: 0.10.0
libtpu: 0.0.40
codegen_flags: <defaults>
</compile_context>

<pallas_src>
import jax
import jax.numpy as jnp
from jax.experimental import pallas as pl
from jax.experimental.pallas import tpu as pltpu

LANES = 128
MAX_BLOCK_ROWS = 4096          # 4096*128 f32 = 2 MiB per input block


def _sublane_multiple(dtype) -> int:
    # f32/int32 -> 8, bf16/f16 -> 16, int8/uint8 -> 32
    return max(8, 32 // jnp.dtype(dtype).itemsize)


def _num_tensorcores() -> int:
    """2 on dual-TensorCore chips (v7x), 1 on v5e/v6e (single TC)."""
    try:
        kind = jax.devices()[0].device_kind.lower()
    except Exception:
        return 1
    return 2 if "v7" in kind else 1


def dice_loss(inputs, targets, smooth=1.0):
    """Pallas TPU implementation of DiceLoss.forward (arbitrary `smooth`)."""
    x = jnp.ravel(inputs)
    t = jnp.ravel(targets)
    # Keep native dtypes (no wrapper-side f32 cast = no extra HBM pass).
    # bool is converted to int8 only for lowering robustness (same byte count).
    if x.dtype == jnp.bool_:
        x = x.astype(jnp.int8)
    if t.dtype == jnp.bool_:
        t = t.astype(jnp.int8)

    n = x.shape[0]

    # Reshape to (rows, 128).  Padding (a copy) only happens if n % 128 != 0.
    n_pad = pl.cdiv(n, LANES) * LANES
    if n_pad != n:
        x = jnp.pad(x, (0, n_pad - n))
        t = jnp.pad(t, (0, n_pad - n))
    rows = n_pad // LANES
    x2 = x.reshape(rows, LANES)
    t2 = t.reshape(rows, LANES)

    sub = max(_sublane_multiple(x2.dtype), _sublane_multiple(t2.dtype))
    block_rows = min(MAX_BLOCK_ROWS, pl.cdiv(rows, sub) * sub)
    num_tiles = pl.cdiv(rows, block_rows)

    num_cores = _num_tensorcores()
    tiles_per_core = pl.cdiv(num_tiles, num_cores)
    block_elems = block_rows * LANES
    folds = block_rows // 8

    def in_map(c, i):
        # Clamp so logical tiles past the end re-read the last real tile; the
        # kernel skips their accumulation entirely (pl.when below).  With
        # num_cores == 1 there are no such tiles.
        return (jnp.minimum(c * tiles_per_core + i, num_tiles - 1), 0)

    def kernel(x_ref, t_ref, o_ref):
        c = pl.program_id(0)
        i = pl.program_id(1)

        @pl.when(i == 0)
        def _():
            o_ref[...] = jnp.zeros_like(o_ref)

        tile = c * tiles_per_core + i

        def accumulate(s, tf):
            # Fold (block_rows, 128) -> (8, 128) with pure VPU adds into the
            # resident output accumulator block.
            o_ref[0, 0] += (s * tf).reshape(folds, 8, LANES).sum(axis=0)  # St
            o_ref[0, 1] += s.reshape(folds, 8, LANES).sum(axis=0)         # S
            o_ref[0, 2] += tf.reshape(folds, 8, LANES).sum(axis=0)        # T

        @pl.when(tile < num_tiles)      # skip duplicated (clamped) tiles
        def _():
            xf = x_ref[...].astype(jnp.float32)
            tf = t_ref[...].astype(jnp.float32)
            # Deferred-affine sigmoid: only the EUP tanh in the hot path.
            s = jnp.tanh(0.5 * xf)

            # Fast path: interior tiles are fully valid, no mask.
            @pl.when(tile < num_tiles - 1)
            def _():
                accumulate(s, tf)

            # Slow path: only the final tile may be partial -> mask by the
            # flat element index (also covers rows past the array end).
            @pl.when(tile == num_tiles - 1)
            def _():
                base = tile * block_elems
                row_ids = jax.lax.broadcasted_iota(
                    jnp.int32, (block_rows, LANES), 0)
                col_ids = jax.lax.broadcasted_iota(
                    jnp.int32, (block_rows, LANES), 1)
                valid = (base + row_ids * LANES + col_ids) < n
                accumulate(jnp.where(valid, s, 0.0),
                           jnp.where(valid, tf, 0.0))

    tile_spec = pl.BlockSpec((block_rows, LANES), in_map)
    partials = pl.pallas_call(
        kernel,
        out_shape=jax.ShapeDtypeStruct((num_cores, 3, 8, LANES), jnp.float32),
        grid_spec=pltpu.PrefetchScalarGridSpec(
            num_scalar_prefetch=0,
            grid=(num_cores, tiles_per_core),
            in_specs=[tile_spec, tile_spec],
            out_specs=pl.BlockSpec((1, 3, 8, LANES), lambda c, i: (c, 0, 0, 0)),
        ),
        compiler_params=pltpu.CompilerParams(
            dimension_semantics=("parallel", "arbitrary"),
            vmem_limit_bytes=32 * 1024 * 1024,   # fits v7x's 64 MiB physical
        ),
    )(x2, t2)

    # Tiny epilogue: fold per-core (8,128) partials to scalars, undo the
    # deferred sigmoid affine, and apply the dice formula.
    sums = jnp.sum(partials, axis=(0, 2, 3))   # [St, S, T]
    intersection = 0.5 * sums[0] + 0.5 * sums[2]
    sum_p = 0.5 * sums[1] + 0.5 * float(n)
    sum_t = sums[2]
    dice = (2.0 * intersection + smooth) / (sum_p + sum_t + smooth)
    return 1.0 - dice


def _dice_loss_ref(inputs, targets, smooth=1.0):
    p = jax.nn.sigmoid(jnp.ravel(inputs).astype(jnp.float32))
    t = jnp.ravel(targets).astype(jnp.float32)
    inter = jnp.sum(p * t)
    dice = (2.0 * inter + smooth) / (jnp.sum(p) + jnp.sum(t) + smooth)
    return 1.0 - dice


if __name__ == "__main__":
    key = jax.random.PRNGKey(0)
    k1, k2 = jax.random.split(key)
    # Typical segmentation shapes: logits and binary targets, NCHW.
    x = jax.random.normal(k1, (2, 4, 16, 16), dtype=jnp.float32)
    tgt = (jax.random.uniform(k2, (2, 4, 16, 16)) > 0.5).astype(jnp.float32)

    loss = dice_loss(x, tgt)
    jax.block_until_ready(loss)

    ref = _dice_loss_ref(x, tgt)
    assert jnp.allclose(loss, ref, atol=1e-5, rtol=1e-5), (loss, ref)
    print("KERNEL_OK")
</pallas_src>

<mosaic_0001>
module attributes {stable_mosaic.version = 11 : i64} {
  func.func @kernel(%arg0: i32, %arg1: i32, %arg2: memref<16x128xf32, #tpu.memory_space<vmem>>, %arg3: memref<16x128xf32, #tpu.memory_space<vmem>>, %arg4: memref<1x3x8x128xf32, #tpu.memory_space<vmem>>) attributes {dimension_semantics = [#tpu.dimension_semantics<parallel>, #tpu.dimension_semantics<arbitrary>], iteration_bounds = array<i64: 1, 1>, scalar_prefetch = 0 : i64, scratch_operands = 0 : i64, tpu.core_type = #tpu.core_type<tc>, window_params = [{transform_indices = @transform_0, window_bounds = array<i64: 16, 128>}, {transform_indices = @transform_1, window_bounds = array<i64: 16, 128>}, {transform_indices = @transform_2, window_bounds = array<i64: 1, 3, 8, 128>}]} {
    %c0_i32 = arith.constant 0 : i32
    %0 = arith.cmpi eq, %arg1, %c0_i32 : i32
    %1 = arith.extui %0 : i1 to i32
    %c0_i32_0 = arith.constant 0 : i32
    %2 = arith.cmpi ne, %1, %c0_i32_0 : i32
    scf.if %2 {
      %cst = arith.constant 0.000000e+00 : f32
      %8 = vector.broadcast %cst : f32 to vector<1x3x8x128xf32>
      %c0 = arith.constant 0 : index
      %c0_3 = arith.constant 0 : index
      %c0_4 = arith.constant 0 : index
      %c0_5 = arith.constant 0 : index
      %9 = vector.load %arg4[%c0, %c0_3, %c0_4, %c0_5] : memref<1x3x8x128xf32, #tpu.memory_space<vmem>>, vector<1x3x8x128xf32>
      tpu.vector_store %arg4[%c0, %c0_3, %c0_4, %c0_5], %8 {strides = array<i32>} : memref<1x3x8x128xf32, #tpu.memory_space<vmem>>, vector<1x3x8x128xf32>,
    } else {
    }
    %c1_i32 = arith.constant 1 : i32
    %3 = arith.muli %arg0, %c1_i32 : i32
    %4 = arith.addi %3, %arg1 : i32
    %c1_i32_1 = arith.constant 1 : i32
    %5 = arith.cmpi slt, %4, %c1_i32_1 : i32
    %6 = arith.extui %5 : i1 to i32
    %c0_i32_2 = arith.constant 0 : i32
    %7 = arith.cmpi ne, %6, %c0_i32_2 : i32
    scf.if %7 {
      %c0 = arith.constant 0 : index
      %c0_3 = arith.constant 0 : index
      %8 = vector.load %arg2[%c0, %c0_3] : memref<16x128xf32, #tpu.memory_space<vmem>>, vector<16x128xf32>
      %c0_4 = arith.constant 0 : index
      %c0_5 = arith.constant 0 : index
      %9 = vector.load %arg3[%c0_4, %c0_5] : memref<16x128xf32, #tpu.memory_space<vmem>>, vector<16x128xf32>
      %cst = arith.constant 5.000000e-01 : f32
      %10 = vector.broadcast %cst : f32 to vector<16x128xf32>
      %11 = arith.mulf %10, %8 : vector<16x128xf32>
      %12 = math.tanh %11 : vector<16x128xf32>
      %c0_i32_6 = arith.constant 0 : i32
      %13 = arith.cmpi slt, %4, %c0_i32_6 : i32
      %14 = arith.extui %13 : i1 to i32
      %c0_i32_7 = arith.constant 0 : i32
      %15 = arith.cmpi ne, %14, %c0_i32_7 : i32
      scf.if %15 {
        %c0_10 = arith.constant 0 : index
        %c0_11 = arith.constant 0 : index
        %c0_12 = arith.constant 0 : index
        %c0_13 = arith.constant 0 : index
        %19 = vector.load %arg4[%c0_10, %c0_11, %c0_12, %c0_13] : memref<1x3x8x128xf32, #tpu.memory_space<vmem>>, vector<1x1x8x128xf32>
        %20 = vector.shape_cast %19 : vector<1x1x8x128xf32> to vector<8x128xf32>
        %21 = arith.mulf %12, %9 : vector<16x128xf32>
        %22 = vector.shape_cast %21 : vector<16x128xf32> to vector<2x8x128xf32>
        %cst_14 = arith.constant dense<0.000000e+00> : vector<8x128xf32>
        %23 = vector.multi_reduction <add>, %22, %cst_14 [0] : vector<2x8x128xf32> to vector<8x128xf32>
        %24 = arith.addf %20, %23 : vector<8x128xf32>
        %c0_15 = arith.constant 0 : index
        %c0_16 = arith.constant 0 : index
        %c0_17 = arith.constant 0 : index
        %c0_18 = arith.constant 0 : index
        %25 = vector.load %arg4[%c0_15, %c0_16, %c0_17, %c0_18] : memref<1x3x8x128xf32, #tpu.memory_space<vmem>>, vector<1x1x8x128xf32>
        %26 = vector.shape_cast %25 : vector<1x1x8x128xf32> to vector<8x128xf32>
        %27 = vector.shape_cast %24 : vector<8x128xf32> to vector<1x1x8x128xf32>
        tpu.vector_store %arg4[%c0_15, %c0_16, %c0_17, %c0_18], %27 {strides = array<i32>} : memref<1x3x8x128xf32, #tpu.memory_space<vmem>>, vector<1x1x8x128xf32>,
        %c0_19 = arith.constant 0 : index
        %c1 = arith.constant 1 : index
        %c0_20 = arith.constant 0 : index
        %c0_21 = arith.constant 0 : index
        %28 = vector.load %arg4[%c0_19, %c1, %c0_20, %c0_21] : memref<1x3x8x128xf32, #tpu.memory_space<vmem>>, vector<1x1x8x128xf32>
        %29 = vector.shape_cast %28 : vector<1x1x8x128xf32> to vector<8x128xf32>
        %30 = vector.shape_cast %12 : vector<16x128xf32> to vector<2x8x128xf32>
        %cst_22 = arith.constant dense<0.000000e+00> : vector<8x128xf32>
        %31 = vector.multi_reduction <add>, %30, %cst_22 [0] : vector<2x8x128xf32> to vector<8x128xf32>
        %32 = arith.addf %29, %31 : vector<8x128xf32>
        %c0_23 = arith.constant 0 : index
        %c1_24 = arith.constant 1 : index
        %c0_25 = arith.constant 0 : index
        %c0_26 = arith.constant 0 : index
        %33 = vector.load %arg4[%c0_23, %c1_24, %c0_25, %c0_26] : memref<1x3x8x128xf32, #tpu.memory_space<vmem>>, vector<1x1x8x128xf32>
        %34 = vector.shape_cast %33 : vector<1x1x8x128xf32> to vector<8x128xf32>
        %35 = vector.shape_cast %32 : vector<8x128xf32> to vector<1x1x8x128xf32>
        tpu.vector_store %arg4[%c0_23, %c1_24, %c0_25, %c0_26], %35 {strides = array<i32>} : memref<1x3x8x128xf32, #tpu.memory_space<vmem>>, vector<1x1x8x128xf32>,
        %c0_27 = arith.constant 0 : index
        %c2 = arith.constant 2 : index
        %c0_28 = arith.constant 0 : index
        %c0_29 = arith.constant 0 : index
        %36 = vector.load %arg4[%c0_27, %c2, %c0_28, %c0_29] : memref<1x3x8x128xf32, #tpu.memory_space<vmem>>, vector<1x1x8x128xf32>
        %37 = vector.shape_cast %36 : vector<1x1x8x128xf32> to vector<8x128xf32>
        %38 = vector.shape_cast %9 : vector<16x128xf32> to vector<2x8x128xf32>
        %cst_30 = arith.constant dense<0.000000e+00> : vector<8x128xf32>
        %39 = vector.multi_reduction <add>, %38, %cst_30 [0] : vector<2x8x128xf32> to vector<8x128xf32>
        %40 = arith.addf %37, %39 : vector<8x128xf32>
        %c0_31 = arith.constant 0 : index
        %c2_32 = arith.constant 2 : index
        %c0_33 = arith.constant 0 : index
        %c0_34 = arith.constant 0 : index
        %41 = vector.load %arg4[%c0_31, %c2_32, %c0_33, %c0_34] : memref<1x3x8x128xf32, #tpu.memory_space<vmem>>, vector<1x1x8x128xf32>
        %42 = vector.shape_cast %41 : vector<1x1x8x128xf32> to vector<8x128xf32>
        %43 = vector.shape_cast %40 : vector<8x128xf32> to vector<1x1x8x128xf32>
        tpu.vector_store %arg4[%c0_31, %c2_32, %c0_33, %c0_34], %43 {strides = array<i32>} : memref<1x3x8x128xf32, #tpu.memory_space<vmem>>, vector<1x1x8x128xf32>,
      } else {
      }
      %c0_i32_8 = arith.constant 0 : i32
      %16 = arith.cmpi eq, %4, %c0_i32_8 : i32
      %17 = arith.extui %16 : i1 to i32
      %c0_i32_9 = arith.constant 0 : i32
      %18 = arith.cmpi ne, %17, %c0_i32_9 : i32
      scf.if %18 {
        %c2048_i32 = arith.constant 2048 : i32
        %19 = arith.muli %4, %c2048_i32 : i32
        %20 = tpu.iota {dimensions = array<i32: 0>} : vector<16x128xi32>
        %21 = tpu.iota {dimensions = array<i32: 1>} : vector<16x128xi32>
        %c128_i32 = arith.constant 128 : i32
        %22 = vector.broadcast %c128_i32 : i32 to vector<16x128xi32>
        %23 = arith.muli %20, %22 : vector<16x128xi32>
        %24 = vector.broadcast %19 : i32 to vector<16x128xi32>
        %25 = arith.addi %24, %23 : vector<16x128xi32>
        %26 = arith.addi %25, %21 : vector<16x128xi32>
        %c2048_i32_10 = arith.constant 2048 : i32
        %27 = vector.broadcast %c2048_i32_10 : i32 to vector<16x128xi32>
        %28 = arith.cmpi slt, %26, %27 : vector<16x128xi32>
        %cst_11 = arith.constant 0.000000e+00 : f32
        %29 = vector.broadcast %cst_11 : f32 to vector<16x128xf32>
        %30 = arith.select %28, %12, %29 : vector<16x128xi1>, vector<16x128xf32>
        %cst_12 = arith.constant 0.000000e+00 : f32
        %31 = vector.broadcast %cst_12 : f32 to vector<16x128xf32>
        %32 = arith.select %28, %9, %31 : vector<16x128xi1>, vector<16x128xf32>
        %c0_13 = arith.constant 0 : index
        %c0_14 = arith.constant 0 : index
        %c0_15 = arith.constant 0 : index
        %c0_16 = arith.constant 0 : index
        %33 = vector.load %arg4[%c0_13, %c0_14, %c0_15, %c0_16] : memref<1x3x8x128xf32, #tpu.memory_space<vmem>>, vector<1x1x8x128xf32>
        %34 = vector.shape_cast %33 : vector<1x1x8x128xf32> to vector<8x128xf32>
        %35 = arith.mulf %30, %32 : vector<16x128xf32>
        %36 = vector.shape_cast %35 : vector<16x128xf32> to vector<2x8x128xf32>
        %cst_17 = arith.constant dense<0.000000e+00> : vector<8x128xf32>
        %37 = vector.multi_reduction <add>, %36, %cst_17 [0] : vector<2x8x128xf32> to vector<8x128xf32>
        %38 = arith.addf %34, %37 : vector<8x128xf32>
        %c0_18 = arith.constant 0 : index
        %c0_19 = arith.constant 0 : index
        %c0_20 = arith.constant 0 : index
        %c0_21 = arith.constant 0 : index
        %39 = vector.load %arg4[%c0_18, %c0_19, %c0_20, %c0_21] : memref<1x3x8x128xf32, #tpu.memory_space<vmem>>, vector<1x1x8x128xf32>
        %40 = vector.shape_cast %39 : vector<1x1x8x128xf32> to vector<8x128xf32>
        %41 = vector.shape_cast %38 : vector<8x128xf32> to vector<1x1x8x128xf32>
        tpu.vector_store %arg4[%c0_18, %c0_19, %c0_20, %c0_21], %41 {strides = array<i32>} : memref<1x3x8x128xf32, #tpu.memory_space<vmem>>, vector<1x1x8x128xf32>,
        %c0_22 = arith.constant 0 : index
        %c1 = arith.constant 1 : index
        %c0_23 = arith.constant 0 : index
        %c0_24 = arith.constant 0 : index
        %42 = vector.load %arg4[%c0_22, %c1, %c0_23, %c0_24] : memref<1x3x8x128xf32, #tpu.memory_space<vmem>>, vector<1x1x8x128xf32>
        %43 = vector.shape_cast %42 : vector<1x1x8x128xf32> to vector<8x128xf32>
        %44 = vector.shape_cast %30 : vector<16x128xf32> to vector<2x8x128xf32>
        %cst_25 = arith.constant dense<0.000000e+00> : vector<8x128xf32>
        %45 = vector.multi_reduction <add>, %44, %cst_25 [0] : vector<2x8x128xf32> to vector<8x128xf32>
        %46 = arith.addf %43, %45 : vector<8x128xf32>
        %c0_26 = arith.constant 0 : index
        %c1_27 = arith.constant 1 : index
        %c0_28 = arith.constant 0 : index
        %c0_29 = arith.constant 0 : index
        %47 = vector.load %arg4[%c0_26, %c1_27, %c0_28, %c0_29] : memref<1x3x8x128xf32, #tpu.memory_space<vmem>>, vector<1x1x8x128xf32>
        %48 = vector.shape_cast %47 : vector<1x1x8x128xf32> to vector<8x128xf32>
        %49 = vector.shape_cast %46 : vector<8x128xf32> to vector<1x1x8x128xf32>
        tpu.vector_store %arg4[%c0_26, %c1_27, %c0_28, %c0_29], %49 {strides = array<i32>} : memref<1x3x8x128xf32, #tpu.memory_space<vmem>>, vector<1x1x8x128xf32>,
        %c0_30 = arith.constant 0 : index
        %c2 = arith.constant 2 : index
        %c0_31 = arith.constant 0 : index
        %c0_32 = arith.constant 0 : index
        %50 = vector.load %arg4[%c0_30, %c2, %c0_31, %c0_32] : memref<1x3x8x128xf32, #tpu.memory_space<vmem>>, vector<1x1x8x128xf32>
        %51 = vector.shape_cast %50 : vector<1x1x8x128xf32> to vector<8x128xf32>
        %52 = vector.shape_cast %32 : vector<16x128xf32> to vector<2x8x128xf32>
        %cst_33 = arith.constant dense<0.000000e+00> : vector<8x128xf32>
        %53 = vector.multi_reduction <add>, %52, %cst_33 [0] : vector<2x8x128xf32> to vector<8x128xf32>
        %54 = arith.addf %51, %53 : vector<8x128xf32>
        %c0_34 = arith.constant 0 : index
        %c2_35 = arith.constant 2 : index
        %c0_36 = arith.constant 0 : index
        %c0_37 = arith.constant 0 : index
        %55 = vector.load %arg4[%c0_34, %c2_35, %c0_36, %c0_37] : memref<1x3x8x128xf32, #tpu.memory_space<vmem>>, vector<1x1x8x128xf32>
        %56 = vector.shape_cast %55 : vector<1x1x8x128xf32> to vector<8x128xf32>
        %57 = vector.shape_cast %54 : vector<8x128xf32> to vector<1x1x8x128xf32>
        tpu.vector_store %arg4[%c0_34, %c2_35, %c0_36, %c0_37], %57 {strides = array<i32>} : memref<1x3x8x128xf32, #tpu.memory_space<vmem>>, vector<1x1x8x128xf32>,
      } else {
      }
    } else {
    }
    return
  }
  func.func @transform_0(%arg0: i32, %arg1: i32) -> (i32, i32) {
    %c1_i32 = arith.constant 1 : i32
    %0 = arith.muli %arg0, %c1_i32 : i32
    %1 = arith.addi %0, %arg1 : i32
    %c0_i32 = arith.constant 0 : i32
    %2 = arith.minsi %1, %c0_i32 : i32
    %c0_i32_0 = arith.constant 0 : i32
    %c0_i32_1 = arith.constant 0 : i32
    return %2, %c0_i32_0 : i32, i32
  }
  func.func @transform_1(%arg0: i32, %arg1: i32) -> (i32, i32) {
    %c1_i32 = arith.constant 1 : i32
    %0 = arith.muli %arg0, %c1_i32 : i32
    %1 = arith.addi %0, %arg1 : i32
    %c0_i32 = arith.constant 0 : i32
    %2 = arith.minsi %1, %c0_i32 : i32
    %c0_i32_0 = arith.constant 0 : i32
    %c0_i32_1 = arith.constant 0 : i32
    return %2, %c0_i32_0 : i32, i32
  }
  func.func @transform_2(%arg0: i32, %arg1: i32) -> (i32, i32, i32, i32) {
    %c0_i32 = arith.constant 0 : i32
    %c0_i32_0 = arith.constant 0 : i32
    %c0_i32_1 = arith.constant 0 : i32
    %c0_i32_2 = arith.constant 0 : i32
    return %arg0, %c0_i32, %c0_i32_0, %c0_i32_1 : i32, i32, i32, i32
  }
}

</mosaic_0001>

<llo_original>
// kernel: tpu_custom_call.1
$region0: #{tpu_custom_call.1}
  #allocation0 [shape = 'u32[]', space=smem, size = 0x4, offset = 0x4, fixed_abs, tag = 'smem constant byte address 0x4 - core index']
  #allocation1 [shape = 'u32[144,128]{1,0:T(1,128)}', space=vmem, size = 0x12000, scoped, tag = 'internal scratch']
  %s0 = inlined_call_operand.hbm [shape: f32[16,128], index: 0, kind: input, shape index: {}]
  %s1 = inlined_call_operand.hbm [shape: f32[16,128], index: 1, kind: input, shape index: {}]
  %s2 = inlined_call_operand.hbm [shape: f32[1,3,8,128], index: 2, kind: output, shape index: {}]
  %s3 = sld [smem:[#allocation0]]
  $region42: #{tpu_custom_call.1} parent=0
    _
  %s5 = ssub.s32 1, %s3
  %s6 = scalar_select 0, %s5, %s3
  $region1: #{tpu_custom_call.1} parent=0
    #allocation2 [shape = 'u8[8192]{0}', space=vmem, size = 0x2000, scoped, tag = 'input window, operand 0, single buffered']
    #allocation3 [shape = 's32[1]{0}', space=sflag, size = 0x4, scoped, tag = 'scoped memory for tpu_custom_call.1']
    #allocation4 [shape = 's32[1]{0}', space=sflag, size = 0x4, scoped, tag = 'scoped memory for tpu_custom_call.1']
    #allocation5 [shape = 'u8[8192]{0}', space=vmem, size = 0x2000, scoped, tag = 'input window, operand 1, single buffered']
    #allocation6 [shape = 's32[1]{0}', space=sflag, size = 0x4, scoped, tag = 'scoped memory for tpu_custom_call.1']
    #allocation7 [shape = 'u8[12288]{0}', space=vmem, size = 0x3000, scoped, tag = 'output window, operand 0, single buffered']
    %7 = vsyncpa [#allocation3], 0
    %8 = vsyncpa [#allocation6], 0
    %9 = vsyncpa [#allocation4], 0
    // Predicated region
    $region2: #{tpu_custom_call.1} parent=1 // pred_check
      _
    $region3: #{tpu_custom_call.1} parent=1 // pred_check_branch
      %11 = sbr.rel (0) target = $region5
    $region4: #{tpu_custom_call.1} parent=1 // pred_region
      %s12 = sadd.s32 0, 0
      %p13 = scmp.lt.s32.totalorder %s12, 0
      %s14 = scalar_select %p13, %s12, 0
      %s15 = smul.u32 2, %s14
      %s17 = ssub.s32 256, 256
      %18 = vsyncadd [#allocation3], %s17
      %s19 = smul.addr %s15, 128
      %s20 = scalar_lea.hbm %s0, %s19
      %s21 = sshll.u32 [#allocation2], 4
      %s22 = int_to_ptr.vmem [resolvable:$true] %s21
      %27 = dma.hbm_to_vmem [thread:$0]  %s20, 256, %s22, [#allocation3], 128, 128, 8
    $region5: #{tpu_custom_call.1} parent=1 // pred_fallthru
      _
    // Predicated region
    $region6: #{tpu_custom_call.1} parent=1 // pred_check
      _
    $region7: #{tpu_custom_call.1} parent=1 // pred_check_branch
      %29 = sbr.rel (0) target = $region9
    $region8: #{tpu_custom_call.1} parent=1 // pred_region
      %s30 = sadd.s32 0, 0
      %p31 = scmp.lt.s32.totalorder %s30, 0
      %s32 = scalar_select %p31, %s30, 0
      %s33 = smul.u32 2, %s32
      %s35 = ssub.s32 256, 256
      %36 = vsyncadd [#allocation6], %s35
      %s37 = smul.addr %s33, 128
      %s38 = scalar_lea.hbm %s1, %s37
      %s39 = sshll.u32 [#allocation5], 4
      %s40 = int_to_ptr.vmem [resolvable:$true] %s39
      %45 = dma.hbm_to_vmem [thread:$0]  %s38, 256, %s40, [#allocation6], 128, 128, 8
    $region9: #{tpu_custom_call.1} parent=1 // pred_fallthru
      _
    // Predicated region
    $region10: #{tpu_custom_call.1} parent=1 // pred_check
      _
    $region11: #{tpu_custom_call.1} parent=1 // pred_check_branch
      %47 = sbr.rel (0) target = $region13
    $region12: #{tpu_custom_call.1} parent=1 // pred_region
      %48 = dma.done [#allocation3], 256
    $region13: #{tpu_custom_call.1} parent=1 // pred_fallthru
      _
    // Predicated region
    $region14: #{tpu_custom_call.1} parent=1 // pred_check
      _
    $region15: #{tpu_custom_call.1} parent=1 // pred_check_branch
      %50 = sbr.rel (0) target = $region17
    $region16: #{tpu_custom_call.1} parent=1 // pred_region
      %51 = dma.done [#allocation6], 256
    $region17: #{tpu_custom_call.1} parent=1 // pred_fallthru
      _
    %s52 = sadd.s32 0, 0
    %p53 = scmp.lt.s32.totalorder %s52, 0
    %s54 = scalar_select %p53, %s52, 0
    %s55 = smul.u32 2, %s54
    %s56 = sadd.s32 0, 0
    %p57 = scmp.lt.s32.totalorder %s56, 0
    %s58 = scalar_select %p57, %s56, 0
    %s59 = smul.u32 2, %s58
    %p60 = scmp.eq.s32.totalorder 0, 0
    // Predicated region
    $region18: #{tpu_custom_call.1} parent=1 // pred_check
      %p61 = pneg %p60
    $region19: #{tpu_custom_call.1} parent=1 // pred_check_branch
      %63 = sbr.rel (%p61) target = $region21
    $region20: #{tpu_custom_call.1} parent=1 // pred_region
      %64 = vst [vmem:[#allocation7] sm:$0xff] 0.0
      %65 = vst [vmem:[#allocation7 + $0x8] sm:$0xff] 0.0
      %66 = vst [vmem:[#allocation7 + $0x10] sm:$0xff] 0.0
    $region21: #{tpu_custom_call.1} parent=1 // pred_fallthru
      _
    %s67 = sadd.s32 0, 0
    %p68 = scmp.lt.s32.totalorder %s67, 1
    // Predicated region
    $region22: #{tpu_custom_call.1} parent=1 // pred_check
      %p69 = pneg %p68
    $region23: #{tpu_custom_call.1} parent=1 // pred_check_branch
      %71 = sbr.rel (%p69) target = $region25
    $region24: #{tpu_custom_call.1} parent=1 // pred_region
      %v72 = vld [vmem:[#allocation2] sm:$0xff]
      %v73 = vld [vmem:[#allocation2 + $0x8] sm:$0xff]
      %v74 = vld [vmem:[#allocation5] sm:$0xff]
      %v75 = vld [vmem:[#allocation5 + $0x8] sm:$0xff]
      %v76 = vmul.f32 %v72, 0.5
      %v77 = vmul.f32 %v73, 0.5
      %v78 = vtanh.pop %v76
      %v79 = vtanh.pop %v77
      %p80 = scmp.lt.s32.totalorder %s67, 0
      // Predicated region
      $region26: #{tpu_custom_call.1} parent=24 // pred_check
        %p81 = pneg %p80
      $region27: #{tpu_custom_call.1} parent=24 // pred_check_branch
        %83 = sbr.rel (%p81) target = $region29
      $region28: #{tpu_custom_call.1} parent=24 // pred_region
        %v84 = vld [vmem:[#allocation7] sm:$0xff]
        %v85 = vmul.f32 %v78, %v74
        %v86 = vmul.f32 %v79, %v75
        %v87 = vadd.f32 %v85, %v86
        %v88 = vadd.f32 %v84, %v87
        %89 = vst [vmem:[#allocation7] sm:$0xff] %v88
        %s90 = scalar_lea.vmem [#allocation7], 8
        %v91 = vld [vmem:[%s90] sm:$0xff]
        %v92 = vadd.f32 %v78, %v79
        %v93 = vadd.f32 %v91, %v92
        %94 = vst [vmem:[%s90] sm:$0xff] %v93
        %s95 = scalar_lea.vmem [#allocation7], 16
        %v96 = vld [vmem:[%s95] sm:$0xff]
        %v97 = vadd.f32 %v74, %v75
        %v98 = vadd.f32 %v96, %v97
        %99 = vst [vmem:[%s95] sm:$0xff] %v98
      $region29: #{tpu_custom_call.1} parent=24 // pred_fallthru
        _
      %p100 = scmp.eq.s32.totalorder %s67, 0
      // Predicated region
      $region30: #{tpu_custom_call.1} parent=24 // pred_check
        %p101 = pneg %p100
      $region31: #{tpu_custom_call.1} parent=24 // pred_check_branch
        %103 = sbr.rel (%p101) target = $region33
      $region32: #{tpu_custom_call.1} parent=24 // pred_region
        %s104 = smul.u32 %s67, 2048
        %v105 = vlaneseq
        %v106 = vshrl.u32 %v105, 7
        %v107 = vadd.s32 %v106, 8
        %v108 = vlaneseq
        %v109 = vand.u32 %v108, 127
        %v110 = vmul.u32 %v106, 128
        %v111 = vmul.u32 %v107, 128
        %v112 = vstv %s104
        %v113 = vadd.s32 %v112, %v110
        %v114 = vadd.s32 %v112, %v111
        %v115 = vadd.s32 %v113, %v109
        %v116 = vadd.s32 %v114, %v109
        %vm117 = vcmp.lt.s32.totalorder %v115, 2048
        %vm118 = vcmp.lt.s32.totalorder %v116, 2048
        %v119 = vsel %vm117, %v78, 0.0
        %v120 = vsel %vm118, %v79, 0.0
        %v121 = vsel %vm117, %v74, 0.0
        %v122 = vsel %vm118, %v75, 0.0
        %v123 = vld [vmem:[#allocation7] sm:$0xff]
        %v124 = vmul.f32 %v119, %v121
        %v125 = vmul.f32 %v120, %v122
        %v126 = vadd.f32 %v124, %v125
        %v127 = vadd.f32 %v123, %v126
        %128 = vst [vmem:[#allocation7] sm:$0xff] %v127
        %s129 = scalar_lea.vmem [#allocation7], 8
        %v130 = vld [vmem:[%s129] sm:$0xff]
        %v131 = vadd.f32 %v119, %v120
        %v132 = vadd.f32 %v130, %v131
        %133 = vst [vmem:[%s129] sm:$0xff] %v132
        %s134 = scalar_lea.vmem [#allocation7], 16
        %v135 = vld [vmem:[%s134] sm:$0xff]
        %v136 = vadd.f32 %v121, %v122
        %v137 = vadd.f32 %v135, %v136
        %138 = vst [vmem:[%s134] sm:$0xff] %v137
      $region33: #{tpu_custom_call.1} parent=24 // pred_fallthru
        _
    $region25: #{tpu_custom_call.1} parent=1 // pred_fallthru
      _
    // Predicated region
    $region34: #{tpu_custom_call.1} parent=1 // pred_check
      _
    $region35: #{tpu_custom_call.1} parent=1 // pred_check_branch
      %140 = sbr.rel (0) target = $region37
    $region36: #{tpu_custom_call.1} parent=1 // pred_region
      %s142 = ssub.s32 384, 384
      %143 = vsyncadd [#allocation4], %s142
      %s144 = sshll.u32 [#allocation7], 4
      %s145 = int_to_ptr.vmem [resolvable:$true] %s144
      %150 = dma.vmem_to_hbm [thread:$0]  %s145, 384, %s2, [#allocation4], 128, 128, 8
    $region37: #{tpu_custom_call.1} parent=1 // pred_fallthru
      _
    // Predicated region
    $region38: #{tpu_custom_call.1} parent=1 // pred_check
      _
    $region39: #{tpu_custom_call.1} parent=1 // pred_check_branch
      %152 = sbr.rel (0) target = $region41
    $region40: #{tpu_custom_call.1} parent=1 // pred_region
      %153 = dma.done [#allocation4], 384
    $region41: #{tpu_custom_call.1} parent=1 // pred_fallthru
      _
    %154 = vsyncpa [#allocation3], 1
    %155 = vsyncpa [#allocation6], 1
    %156 = vsyncpa [#allocation4], 1

</llo_original>
